<compile_context>
chip_gen: v6e
topology: v6e:2x2x1
jax: 0.10.0
libtpu: 0.0.40
codegen_flags: <defaults>
</compile_context>

<pallas_src>
import functools

import numpy as np
import jax
import jax.numpy as jnp
from jax.experimental import pallas as pl
from jax.experimental.pallas import tpu as pltpu


_MAX_IN_SLAB_BYTES = 4 * 1024 * 1024     # per-step input slab target (all gens)
_VMEM_BLOCK_BUDGET = 32 * 1024 * 1024    # in/out double-buffered + f32 acc + P
_VMEM_LIMIT_BYTES = 48 * 1024 * 1024     # <= v7x-safe scoped VMEM limit


# ------------------------------- kernels ----------------------------------- #

def _shuffle_up_kernel(x_ref, p_ref, o_ref):
    """Pixel shuffle (depth-to-space) for one (batch, channel-block) slab.

    x_ref: (1, C_blk, r, r, H, W)       free view of NCHW input
    p_ref: (r*r, W, r*r*W)              p[i*r+j, w, i*W*r + w*r + j] = 1
    o_ref: (1, C_blk, H, r*W*r)         o[0,c,h, i*(W*r) + w*r + j] = x[0,c,i,j,h,w]
    """
    _, c_blk, r, _, h, w = x_ref.shape
    n_out = o_ref.shape[-1]                       # r * W * r
    acc = None
    for i in range(r):
        for j in range(r):
            # (C_blk*H, W) @ (W, r*r*W): column w lands at lane i*W*r + w*r + j.
            xij = x_ref[0, :, i, j, :, :].reshape(c_blk * h, w)
            part = jnp.dot(xij, p_ref[i * r + j],
                           preferred_element_type=jnp.float32)
            acc = part if acc is None else acc + part
    # One full-width, lane-dense store per block.
    o_ref[0, :, :, :] = acc.reshape(c_blk, h, n_out).astype(o_ref.dtype)


def _shuffle_down_kernel(x_ref, s_ref, o_ref):
    """Pixel unshuffle (space-to-depth) for one (batch, channel-block) slab.

    x_ref: (1, C_blk, oh, bs*W)        x[0,c,h, i*W + col] = img[c, h*bs+i, col]
    s_ref: (bs, W, ow)                 s[j, w*bs + j, w] = 1
    o_ref: (1, C_blk, bs, bs, oh, ow)  o[0,c,i,j,h,w] = img[c, h*bs+i, w*bs+j]
    """
    _, c_blk, oh, _ = x_ref.shape
    bs, w_full, ow = s_ref.shape
    for i in range(bs):
        # Rows h*bs + i of the original image, all channels of the block.
        xi = x_ref[0, :, :, i * w_full:(i + 1) * w_full].reshape(c_blk * oh, w_full)
        for j in range(bs):
            # (C_blk*oh, W) @ (W, ow): selects columns w*bs + j.
            u = jnp.dot(xi, s_ref[j], preferred_element_type=jnp.float32)
            o_ref[0, :, i, j, :, :] = u.reshape(c_blk, oh, ow).astype(o_ref.dtype)
    # TODO(synk): stored lane width is ow (< 128 for narrow maps); a fully
    # lane-dense store needs a verified in-VMEM (oh, ow)->lane merge (Mosaic
    # shape-cast across tiled dims).  The proven layout is kept and the 128-lane
    # padding is instead accounted for in the VMEM block budget.


# ------------------- constant 0/1 permutation matrices --------------------- #

@functools.lru_cache(maxsize=None)
def _perm_up(w, r, dtype_name):
    # p[i*r + j, ww, i*(W*r) + ww*r + j] = 1: one matrix per sub-pixel with the
    # output-column offset baked in, so the kernel accumulates into a single
    # full-width result and stores it once.
    n_out = r * r * w
    p = np.zeros((r * r, w, n_out), dtype=np.float32)
    ww = np.arange(w)
    for i in range(r):
        for j in range(r):
            p[i * r + j, ww, i * (w * r) + ww * r + j] = 1.0
    return jnp.asarray(p, dtype=jnp.dtype(dtype_name))


@functools.lru_cache(maxsize=None)
def _sel_down(w, bs, dtype_name):
    # s[j, ww*bs + j, ww] = 1
    ow = w // bs
    s = np.zeros((bs, w, ow), dtype=np.float32)
    ww = np.arange(ow)
    for j in range(bs):
        s[j, ww * bs + j, ww] = 1.0
    return jnp.asarray(s, dtype=jnp.dtype(dtype_name))


# ------------------------------ helpers ------------------------------------ #

def _round_up(n, m):
    return ((n + m - 1) // m) * m


def _sublane_pack(itemsize):
    return {4: 8, 2: 16, 1: 32}.get(itemsize, 8)


def _vmem_block_bytes(shape, itemsize):
    """Approx VMEM bytes of a block after (sublane, lane) padding of minor dims."""
    shape = tuple(int(d) for d in shape)
    if len(shape) < 2:
        return _round_up(int(np.prod(shape, dtype=np.int64)) * itemsize, 512)
    lead = 1
    for d in shape[:-2]:
        lead *= d
    sub = _round_up(shape[-2], _sublane_pack(itemsize))
    lane = _round_up(shape[-1], 128)
    return lead * sub * lane * itemsize


def _pick_channel_block(n_channels, batch, block_bytes_fn):
    """Largest channel divisor meeting the slab/VMEM budgets and a >=2-pt grid."""
    max_blk = n_channels if batch > 1 else max(1, n_channels // 2)
    best = 1
    for d in range(1, n_channels + 1):
        if n_channels % d or d > max_blk:
            continue
        in_b, total_b = block_bytes_fn(d)
        if in_b <= _MAX_IN_SLAB_BYTES and total_b <= _VMEM_BLOCK_BUDGET:
            best = d
    return best


# ------------------------- pure-JAX reference ------------------------------ #

def _pixel_shuffle_ref(x, scale_factor):
    b, c, h, w = x.shape
    if scale_factor >= 1:
        r = int(round(scale_factor))
        oc = c // (r * r)
        v = x.reshape(b, oc, r, r, h, w).transpose(0, 1, 4, 2, 5, 3)
        return v.reshape(b, oc, h * r, w * r)
    else:
        bs = int(round(1.0 / scale_factor))
        oh, ow = h // bs, w // bs
        v = x.reshape(b, c, oh, bs, ow, bs).transpose(0, 1, 3, 5, 2, 4)
        return v.reshape(b, c * bs * bs, oh, ow)


# ------------------------------ wrapper ------------------------------------ #

def pixel_shuffle_pallas(x, scale_factor):
    b, c, h, w = x.shape
    orig_dtype = x.dtype

    if not jnp.issubdtype(orig_dtype, jnp.floating):
        # TODO(synk): a lossless fused integer path needs an int-MXU (v5e/v6e)
        # or roll/select (v7x) kernel; the f32 round-trip would silently round
        # |x| > 2^24, so integers take the plain XLA permutation instead.
        return _pixel_shuffle_ref(x, scale_factor)

    dtype = x.dtype
    itemsize = jnp.dtype(dtype).itemsize
    dims_parallel = pltpu.CompilerParams(
        dimension_semantics=("parallel", "parallel"),
        vmem_limit_bytes=_VMEM_LIMIT_BYTES)

    if scale_factor >= 1:
        r = int(round(scale_factor))
        if abs(scale_factor - r) > 1e-6 or r < 1:
            raise ValueError(f"scale_factor >= 1 must be integral, got {scale_factor}")
        if c % (r * r) != 0:
            raise ValueError("channels must be divisible by scale_factor**2")
        oc = c // (r * r)
        n_out = r * r * w
        x6 = x.reshape(b, oc, r, r, h, w)                    # free NCHW view
        p = _perm_up(w, r, jnp.dtype(dtype).name)

        def block_bytes(d):
            in_b = _vmem_block_bytes((d, r, r, h, w), itemsize)
            out_b = _vmem_block_bytes((d, h, n_out), itemsize)
            acc_b = _vmem_block_bytes((d * h, n_out), 4)
            p_b = _vmem_block_bytes((r * r, w, n_out), itemsize)
            return in_b, 2 * (in_b + out_b) + acc_b + 2 * p_b

        c_blk = _pick_channel_block(oc, b, block_bytes)
        grid = (b, oc // c_blk)
        macs = b * oc * h * (r ** 4) * w * w
        cost = pl.CostEstimate(
            flops=2 * macs, transcendentals=0,
            bytes_accessed=2 * b * c * h * w * itemsize + int(p.size) * itemsize)

        out = pl.pallas_call(
            _shuffle_up_kernel,
            out_shape=jax.ShapeDtypeStruct((b, oc, h, n_out), dtype),
            grid=grid,
            in_specs=[
                pl.BlockSpec((1, c_blk, r, r, h, w),
                             lambda bi, ci: (bi, ci, 0, 0, 0, 0)),
                pl.BlockSpec((r * r, w, n_out), lambda bi, ci: (0, 0, 0)),
            ],
            out_specs=pl.BlockSpec((1, c_blk, h, n_out),
                                   lambda bi, ci: (bi, ci, 0, 0)),
            compiler_params=dims_parallel,
            cost_estimate=cost,
        )(x6, p)
        return out.reshape(b, oc, h * r, w * r)              # free merge

    else:
        inv = 1.0 / scale_factor
        bs = int(round(inv))
        if bs < 1 or abs(inv - bs) > 1e-6:
            raise ValueError(f"1/scale_factor must be integral, got {scale_factor}")
        if h % bs != 0 or w % bs != 0:
            raise ValueError("spatial dims must be divisible by 1/scale_factor")
        oh, ow = h // bs, w // bs
        x4 = x.reshape(b, c, oh, bs * w)                      # free NCHW view
        s = _sel_down(w, bs, jnp.dtype(dtype).name)

        def block_bytes(d):
            in_b = _vmem_block_bytes((d, oh, bs * w), itemsize)
            out_b = d * bs * bs * _vmem_block_bytes((oh, ow), itemsize)
            acc_b = _vmem_block_bytes((d * oh, ow), 4)
            s_b = _vmem_block_bytes((bs, w, ow), itemsize)
            return in_b, 2 * (in_b + out_b) + acc_b + 2 * s_b

        c_blk = _pick_channel_block(c, b, block_bytes)
        grid = (b, c // c_blk)
        macs = b * c * bs * bs * oh * w * ow
        cost = pl.CostEstimate(
            flops=2 * macs, transcendentals=0,
            bytes_accessed=2 * b * c * h * w * itemsize + int(s.size) * itemsize)

        out6 = pl.pallas_call(
            _shuffle_down_kernel,
            out_shape=jax.ShapeDtypeStruct((b, c, bs, bs, oh, ow), dtype),
            grid=grid,
            in_specs=[
                pl.BlockSpec((1, c_blk, oh, bs * w),
                             lambda bi, ci: (bi, ci, 0, 0)),
                pl.BlockSpec((bs, w, ow), lambda bi, ci: (0, 0, 0)),
            ],
            out_specs=pl.BlockSpec((1, c_blk, bs, bs, oh, ow),
                                   lambda bi, ci: (bi, ci, 0, 0, 0, 0)),
            compiler_params=dims_parallel,
            cost_estimate=cost,
        )(x4, s)
        return out6.reshape(b, c * bs * bs, oh, ow)           # free merge


class PixelShuffleD:
    """JAX/Pallas port of models.descratch_arch.PixelShuffleD (NCHW, no params)."""

    def __init__(self, scale_factor):
        self.scale_factor = scale_factor

    def __call__(self, x):
        return pixel_shuffle_pallas(x, self.scale_factor)


if __name__ == "__main__":
    key = jax.random.PRNGKey(0)
    x = jax.random.normal(key, (2, 4, 16, 16), dtype=jnp.float32)

    # Upscale path (scale_factor = 2): (2, 4, 16, 16) -> (2, 1, 32, 32)
    y_up = PixelShuffleD(2)(x)
    jax.block_until_ready(y_up)
    assert y_up.shape == (2, 1, 32, 32)
    assert jnp.allclose(y_up, _pixel_shuffle_ref(x, 2), atol=1e-6), "up mismatch"

    # Downscale path (scale_factor = 0.5): (2, 4, 16, 16) -> (2, 16, 8, 8)
    y_down = PixelShuffleD(0.5)(x)
    jax.block_until_ready(y_down)
    assert y_down.shape == (2, 16, 8, 8)
    assert jnp.allclose(y_down, _pixel_shuffle_ref(x, 0.5), atol=1e-6), "down mismatch"

    print("KERNEL_OK")
</pallas_src>

<mosaic_0001>
module attributes {stable_mosaic.version = 11 : i64} {
  func.func @_shuffle_up_kernel(%arg0: i32, %arg1: i32, %arg2: memref<1x1x2x2x16x16xf32, #tpu.memory_space<vmem>>, %arg3: memref<4x16x64xf32, #tpu.memory_space<vmem>>, %arg4: memref<1x1x16x64xf32, #tpu.memory_space<vmem>>) attributes {dimension_semantics = [#tpu.dimension_semantics<parallel>, #tpu.dimension_semantics<parallel>], iteration_bounds = array<i64: 2, 1>, scalar_prefetch = 0 : i64, scratch_operands = 0 : i64, tpu.core_type = #tpu.core_type<tc>, window_params = [{transform_indices = @transform_0, window_bounds = array<i64: 1, 1, 2, 2, 16, 16>}, {pipeline_mode = #tpu.pipeline_mode<synchronous>, transform_indices = @transform_1, window_bounds = array<i64: 4, 16, 64>}, {transform_indices = @transform_2, window_bounds = array<i64: 1, 1, 16, 64>}]} {
    %c0 = arith.constant 0 : index
    %c0_0 = arith.constant 0 : index
    %c0_1 = arith.constant 0 : index
    %c0_2 = arith.constant 0 : index
    %c0_3 = arith.constant 0 : index
    %c0_4 = arith.constant 0 : index
    %0 = vector.load %arg2[%c0, %c0_0, %c0_1, %c0_2, %c0_3, %c0_4] : memref<1x1x2x2x16x16xf32, #tpu.memory_space<vmem>>, vector<1x1x1x1x16x16xf32>
    %1 = vector.shape_cast %0 : vector<1x1x1x1x16x16xf32> to vector<1x16x16xf32>
    %2 = vector.shape_cast %1 : vector<1x16x16xf32> to vector<16x16xf32>
    %c0_5 = arith.constant 0 : index
    %c0_6 = arith.constant 0 : index
    %c0_7 = arith.constant 0 : index
    %3 = vector.load %arg3[%c0_5, %c0_6, %c0_7] : memref<4x16x64xf32, #tpu.memory_space<vmem>>, vector<1x16x64xf32>
    %4 = vector.shape_cast %3 : vector<1x16x64xf32> to vector<16x64xf32>
    %cst = arith.constant dense<0.000000e+00> : vector<16x64xf32>
    %5 = tpu.matmul %2, %4, %cst {dimension_numbers = #tpu.dot_dimension_numbers<[1], [0], [0], [1], [0, 0, 1, 1], [], []>} : vector<16x16xf32>, vector<16x64xf32>, vector<16x64xf32> -> vector<16x64xf32>
    %c0_8 = arith.constant 0 : index
    %c0_9 = arith.constant 0 : index
    %c0_10 = arith.constant 0 : index
    %c1 = arith.constant 1 : index
    %c0_11 = arith.constant 0 : index
    %c0_12 = arith.constant 0 : index
    %6 = vector.load %arg2[%c0_8, %c0_9, %c0_10, %c1, %c0_11, %c0_12] : memref<1x1x2x2x16x16xf32, #tpu.memory_space<vmem>>, vector<1x1x1x1x16x16xf32>
    %7 = vector.shape_cast %6 : vector<1x1x1x1x16x16xf32> to vector<1x16x16xf32>
    %8 = vector.shape_cast %7 : vector<1x16x16xf32> to vector<16x16xf32>
    %c1_13 = arith.constant 1 : index
    %c0_14 = arith.constant 0 : index
    %c0_15 = arith.constant 0 : index
    %9 = vector.load %arg3[%c1_13, %c0_14, %c0_15] : memref<4x16x64xf32, #tpu.memory_space<vmem>>, vector<1x16x64xf32>
    %10 = vector.shape_cast %9 : vector<1x16x64xf32> to vector<16x64xf32>
    %cst_16 = arith.constant dense<0.000000e+00> : vector<16x64xf32>
    %11 = tpu.matmul %8, %10, %cst_16 {dimension_numbers = #tpu.dot_dimension_numbers<[1], [0], [0], [1], [0, 0, 1, 1], [], []>} : vector<16x16xf32>, vector<16x64xf32>, vector<16x64xf32> -> vector<16x64xf32>
    %12 = arith.addf %5, %11 : vector<16x64xf32>
    %c0_17 = arith.constant 0 : index
    %c0_18 = arith.constant 0 : index
    %c1_19 = arith.constant 1 : index
    %c0_20 = arith.constant 0 : index
    %c0_21 = arith.constant 0 : index
    %c0_22 = arith.constant 0 : index
    %13 = vector.load %arg2[%c0_17, %c0_18, %c1_19, %c0_20, %c0_21, %c0_22] : memref<1x1x2x2x16x16xf32, #tpu.memory_space<vmem>>, vector<1x1x1x1x16x16xf32>
    %14 = vector.shape_cast %13 : vector<1x1x1x1x16x16xf32> to vector<1x16x16xf32>
    %15 = vector.shape_cast %14 : vector<1x16x16xf32> to vector<16x16xf32>
    %c2 = arith.constant 2 : index
    %c0_23 = arith.constant 0 : index
    %c0_24 = arith.constant 0 : index
    %16 = vector.load %arg3[%c2, %c0_23, %c0_24] : memref<4x16x64xf32, #tpu.memory_space<vmem>>, vector<1x16x64xf32>
    %17 = vector.shape_cast %16 : vector<1x16x64xf32> to vector<16x64xf32>
    %cst_25 = arith.constant dense<0.000000e+00> : vector<16x64xf32>
    %18 = tpu.matmul %15, %17, %cst_25 {dimension_numbers = #tpu.dot_dimension_numbers<[1], [0], [0], [1], [0, 0, 1, 1], [], []>} : vector<16x16xf32>, vector<16x64xf32>, vector<16x64xf32> -> vector<16x64xf32>
    %19 = arith.addf %12, %18 : vector<16x64xf32>
    %c0_26 = arith.constant 0 : index
    %c0_27 = arith.constant 0 : index
    %c1_28 = arith.constant 1 : index
    %c1_29 = arith.constant 1 : index
    %c0_30 = arith.constant 0 : index
    %c0_31 = arith.constant 0 : index
    %20 = vector.load %arg2[%c0_26, %c0_27, %c1_28, %c1_29, %c0_30, %c0_31] : memref<1x1x2x2x16x16xf32, #tpu.memory_space<vmem>>, vector<1x1x1x1x16x16xf32>
    %21 = vector.shape_cast %20 : vector<1x1x1x1x16x16xf32> to vector<1x16x16xf32>
    %22 = vector.shape_cast %21 : vector<1x16x16xf32> to vector<16x16xf32>
    %c3 = arith.constant 3 : index
    %c0_32 = arith.constant 0 : index
    %c0_33 = arith.constant 0 : index
    %23 = vector.load %arg3[%c3, %c0_32, %c0_33] : memref<4x16x64xf32, #tpu.memory_space<vmem>>, vector<1x16x64xf32>
    %24 = vector.shape_cast %23 : vector<1x16x64xf32> to vector<16x64xf32>
    %cst_34 = arith.constant dense<0.000000e+00> : vector<16x64xf32>
    %25 = tpu.matmul %22, %24, %cst_34 {dimension_numbers = #tpu.dot_dimension_numbers<[1], [0], [0], [1], [0, 0, 1, 1], [], []>} : vector<16x16xf32>, vector<16x64xf32>, vector<16x64xf32> -> vector<16x64xf32>
    %26 = arith.addf %19, %25 : vector<16x64xf32>
    %27 = vector.shape_cast %26 : vector<16x64xf32> to vector<1x16x64xf32>
    %c0_35 = arith.constant 0 : index
    %c0_36 = arith.constant 0 : index
    %c0_37 = arith.constant 0 : index
    %c0_38 = arith.constant 0 : index
    %28 = vector.load %arg4[%c0_35, %c0_36, %c0_37, %c0_38] : memref<1x1x16x64xf32, #tpu.memory_space<vmem>>, vector<1x1x16x64xf32>
    %29 = vector.shape_cast %28 : vector<1x1x16x64xf32> to vector<1x16x64xf32>
    %30 = vector.shape_cast %27 : vector<1x16x64xf32> to vector<1x1x16x64xf32>
    tpu.vector_store %arg4[%c0_35, %c0_36, %c0_37, %c0_38], %30 {strides = array<i32>} : memref<1x1x16x64xf32, #tpu.memory_space<vmem>>, vector<1x1x16x64xf32>,
    return
  }
  func.func @transform_0(%arg0: i32, %arg1: i32) -> (i32, i32, i32, i32, i32, i32) {
    %c0_i32 = arith.constant 0 : i32
    %c0_i32_0 = arith.constant 0 : i32
    %c0_i32_1 = arith.constant 0 : i32
    %c0_i32_2 = arith.constant 0 : i32
    %c0_i32_3 = arith.constant 0 : i32
    return %arg0, %arg1, %c0_i32, %c0_i32_0, %c0_i32_1, %c0_i32_2 : i32, i32, i32, i32, i32, i32
  }
  func.func @transform_1(%arg0: i32, %arg1: i32) -> (i32, i32, i32) {
    %c0_i32 = arith.constant 0 : i32
    %c0_i32_0 = arith.constant 0 : i32
    %c0_i32_1 = arith.constant 0 : i32
    %c0_i32_2 = arith.constant 0 : i32
    return %c0_i32, %c0_i32_0, %c0_i32_1 : i32, i32, i32
  }
  func.func @transform_2(%arg0: i32, %arg1: i32) -> (i32, i32, i32, i32) {
    %c0_i32 = arith.constant 0 : i32
    %c0_i32_0 = arith.constant 0 : i32
    %c0_i32_1 = arith.constant 0 : i32
    return %arg0, %arg1, %c0_i32, %c0_i32_0 : i32, i32, i32, i32
  }
}

</mosaic_0001>

<llo_original>
// kernel: tpu_custom_call.1
$region0: #{tpu_custom_call.1}
  #allocation0 [shape = 'u32[]', space=smem, size = 0x4, offset = 0x4, fixed_abs, tag = 'smem constant byte address 0x4 - core index']
  #allocation1 [shape = 'u32[144,128]{1,0:T(1,128)}', space=vmem, size = 0x12000, scoped, tag = 'internal scratch']
  %s0 = inlined_call_operand.hbm [shape: f32[2,1,2,2,16,16], index: 0, kind: input, shape index: {}]
  %s1 = inlined_call_operand.hbm [shape: f32[4,16,64], index: 1, kind: input, shape index: {}]
  %s2 = inlined_call_operand.hbm [shape: f32[2,1,16,64], index: 2, kind: output, shape index: {}]
  %s3 = sld [smem:[#allocation0]]
  $region49: #{tpu_custom_call.1} parent=0
    _
  %s5 = ssub.s32 1, %s3
  %s6 = scalar_select 0, %s5, %s3
  $region1: #{tpu_custom_call.1} parent=0
    #allocation2 [shape = 'u8[65536]{0}', space=vmem, size = 0x10000, scoped, tag = 'input window, operand 0']
    #allocation3 [shape = 's32[2]{0}', space=sflag, size = 0x8, scoped, tag = 'scoped memory for tpu_custom_call.1']
    #allocation4 [shape = 's32[2]{0}', space=sflag, size = 0x8, scoped, tag = 'scoped memory for tpu_custom_call.1']
    #allocation5 [shape = 'u8[32768]{0}', space=vmem, size = 0x8000, scoped, tag = 'input window, operand 1, single buffered']
    #allocation6 [shape = 's32[1]{0}', space=sflag, size = 0x4, scoped, tag = 'scoped memory for tpu_custom_call.1']
    #allocation7 [shape = 'u8[16384]{0}', space=vmem, size = 0x4000, scoped, tag = 'output window, operand 0']
    %7 = vsyncpa [#allocation3], 0
    %s8 = scalar_lea.sflag [#allocation3], 1
    %9 = vsyncpa %s8, 0
    %10 = vsyncpa [#allocation6], 0
    %11 = vsyncpa [#allocation4], 0
    %s12 = scalar_lea.sflag [#allocation4], 1
    %13 = vsyncpa %s12, 0
    loop: start=0, step=1, limit=4
    $region2: #{tpu_custom_call.1} parent=1 // loop_pre_header
      _
    $region3: #{tpu_custom_call.1} parent=1 // loop_header
      %s15 = sphi 0, %s19
      %p16 = scmp.ge.s32.totalorder %s15, 4
      %s22 = sphi 0, %s34
      %s23 = sphi 0, %s30
      %s24 = sphi 0, %s22
      %s25 = sphi 0, %s23
      %s26 = sphi 0, %s24
      %s27 = sphi 0, %s25
      %s39 = sphi 0, %s41
      %s42 = sphi 0, %s39
      %s43 = sphi 0, %s42
      %s59 = sphi 0, %s43
      %s63 = sphi 0, %s63
      %s65 = sphi 0, %s63
      %s66 = sphi 0, %s65
      %s80 = sphi 0, %s66
      %s88 = sphi 0, %s90
      %s91 = sphi 0, %s88
      %s92 = sphi 0, %s91
      %s108 = sphi 0, %s92
    $region4: #{tpu_custom_call.1} parent=1 // loop_header_branch
      %18 = sbr.rel (%p16) target = $region8
    $region5: #{tpu_custom_call.1} parent=1 // loop_body
      %s20 = ssub.s32 %s15, 1
      %s21 = ssub.s32 %s15, 2
      %s28 = sadd.s32 1, %s23
      %p29 = scmp.ge.s32.totalorder %s28, 1
      %s30 = scalar_select %p29, 0, %s28
      %s31 = sadd.s32 1, %s22
      %s32 = scalar_select %p29, %s31, %s22
      %p33 = scmp.ge.s32.totalorder %s32, 2
      %s34 = scalar_select %p33, 0, %s32
      %s35 = ssub.s32 %s22, %s34
      %s36 = ssub.s32 %s23, %s30
      %s37 = sor.u32 %s35, %s36
      %p38 = scmp.eq.s32.totalorder %s37, 0
      %s40 = sadd.s32 %s39, 1
      %s41 = scalar_select %p38, %s39, %s40
      %p44 = pneg %p38
      %p45 = scmp.eq.s32.totalorder %s15, 1
      %p46 = por %p44, %p45
      %p47 = scmp.ne.s32.totalorder %s39, %s42
      %p48 = scmp.eq.s32.totalorder %s15, 0
      %p49 = por %p47, %p48
      %p50 = scmp.ne.s32.totalorder %s39, %s42
      %p51 = scmp.eq.s32.totalorder %s20, 1
      %p52 = por %p50, %p51
      %p53 = scmp.ne.s32.totalorder %s42, %s43
      %p54 = scmp.eq.s32.totalorder %s20, 0
      %p55 = por %p53, %p54
      %p56 = scmp.ne.s32.totalorder %s42, %s43
      %p57 = scmp.eq.s32.totalorder %s21, 1
      %p58 = por %p56, %p57
      %p60 = scmp.ne.s32.totalorder %s43, %s59
      %p61 = scmp.eq.s32.totalorder %s21, 0
      %p62 = por %p60, %p61
      %s64 = sadd.s32 %s63, 1
      %p67 = scmp.eq.s32.totalorder %s15, 1
      %p68 = scmp.ne.s32.totalorder %s63, %s65
      %p69 = scmp.eq.s32.totalorder %s15, 0
      %p70 = por %p68, %p69
      %p71 = scmp.ne.s32.totalorder %s63, %s65
      %p72 = scmp.eq.s32.totalorder %s20, 1
      %p73 = por %p71, %p72
      %p74 = scmp.ne.s32.totalorder %s65, %s66
      %p75 = scmp.eq.s32.totalorder %s20, 0
      %p76 = por %p74, %p75
      %p77 = scmp.ne.s32.totalorder %s65, %s66
      %p78 = scmp.eq.s32.totalorder %s21, 1
      %p79 = por %p77, %p78
      %p81 = scmp.ne.s32.totalorder %s66, %s80
      %p82 = scmp.eq.s32.totalorder %s21, 0
      %p83 = por %p81, %p82
      %s84 = ssub.s32 %s22, %s34
      %s85 = ssub.s32 %s23, %s30
      %s86 = sor.u32 %s84, %s85
      %p87 = scmp.eq.s32.totalorder %s86, 0
      %s89 = sadd.s32 %s88, 1
      %s90 = scalar_select %p87, %s88, %s89
      %p93 = pneg %p87
      %p94 = scmp.eq.s32.totalorder %s15, 1
      %p95 = por %p93, %p94
      %p96 = scmp.ne.s32.totalorder %s88, %s91
      %p97 = scmp.eq.s32.totalorder %s15, 0
      %p98 = por %p96, %p97
      %p99 = scmp.ne.s32.totalorder %s88, %s91
      %p100 = scmp.eq.s32.totalorder %s20, 1
      %p101 = por %p99, %p100
      %p102 = scmp.ne.s32.totalorder %s91, %s92
      %p103 = scmp.eq.s32.totalorder %s20, 0
      %p104 = por %p102, %p103
      %p105 = scmp.ne.s32.totalorder %s91, %s92
      %p106 = scmp.eq.s32.totalorder %s21, 1
      %p107 = por %p105, %p106
      %p109 = scmp.ne.s32.totalorder %s92, %s108
      %p110 = scmp.eq.s32.totalorder %s21, 0
      %p111 = por %p109, %p110
      %p112 = scmp.le.s32.totalorder 1, %s15
      %p113 = scmp.lt.s32.totalorder %s15, 3
      %p114 = pnand %p112, %p113
      %p115 = pneg %p114
      // Predicated region
      $region9: #{tpu_custom_call.1} parent=5 // pred_check
        _
      $region10: #{tpu_custom_call.1} parent=5 // pred_check_branch
        %117 = sbr.rel (%p114) target = $region12
      $region11: #{tpu_custom_call.1} parent=5 // pred_region
        %s118 = ssub.s32 %s15, 1
        // Predicated region
        $region13: #{tpu_custom_call.1} parent=11 // pred_check
          %p119 = pneg %p76
        $region14: #{tpu_custom_call.1} parent=11 // pred_check_branch
          %121 = sbr.rel (%p119) target = $region16
        $region15: #{tpu_custom_call.1} parent=11 // pred_region
          %s123 = ssub.s32 1024, 1024
          %124 = vsyncadd [#allocation6], %s123
          %s125 = sshll.u32 [#allocation5], 4
          %s126 = int_to_ptr.vmem [resolvable:$true] %s125
          %131 = dma.hbm_to_vmem [thread:$0]  %s1, 1024, %s126, [#allocation6], 128, 128, 8
        $region16: #{tpu_custom_call.1} parent=11 // pred_fallthru
          _
      $region12: #{tpu_custom_call.1} parent=5 // pred_fallthru
        _
      %p132 = scmp.lt.s32.totalorder %s15, 2
      // Predicated region
      $region17: #{tpu_custom_call.1} parent=5 // pred_check
        %p133 = pneg %p132
      $region18: #{tpu_custom_call.1} parent=5 // pred_check_branch
        %135 = sbr.rel (%p133) target = $region20
      $region19: #{tpu_custom_call.1} parent=5 // pred_region
        // Predicated region
        $region21: #{tpu_custom_call.1} parent=19 // pred_check
          %p136 = pneg %p49
        $region22: #{tpu_custom_call.1} parent=19 // pred_check_branch
          %138 = sbr.rel (%p136) target = $region24
        $region23: #{tpu_custom_call.1} parent=19 // pred_region
          %s139 = sand.u32 %s39, 1
          %s140 = scalar_lea.sflag [#allocation3], %s139
          %s141 = sand.u32 %s39, 1
          %s142 = smul.addr %s141, 64
          %s143 = scalar_lea.vmem [#allocation2], %s142
          %s145 = ssub.s32 1024, 1024
          %146 = vsyncadd %s140, %s145
          %s147 = smul.addr %s23, 8
          %s148 = smul.addr %s22, 8
          %s149 = sadd.s32 %s147, %s148
          %s150 = smul.addr %s149, 128
          %s151 = scalar_lea.hbm %s0, %s150
          %s152 = sshll.u32 %s143, 4
          %s153 = int_to_ptr.vmem [resolvable:$true] %s152
          %158 = dma.hbm_to_vmem [thread:$0]  %s151, 1024, %s153, %s140, 128, 128, 8
        $region24: #{tpu_custom_call.1} parent=19 // pred_fallthru
          _
      $region20: #{tpu_custom_call.1} parent=5 // pred_fallthru
        _
      %p159 = scmp.le.s32.totalorder 1, %s15
      %p160 = scmp.lt.s32.totalorder %s15, 3
      %p161 = pnand %p159, %p160
      %p162 = pneg %p161
      // Predicated region
      $region25: #{tpu_custom_call.1} parent=5 // pred_check
        _
      $region26: #{tpu_custom_call.1} parent=5 // pred_check_branch
        %164 = sbr.rel (%p161) target = $region28
      $region27: #{tpu_custom_call.1} parent=5 // pred_region
        %s165 = ssub.s32 %s15, 1
        %s166 = sand.u32 %s42, 1
        %s167 = scalar_lea.sflag [#allocation3], %s166
        %s168 = sand.u32 %s42, 1
        %s169 = smul.addr %s168, 64
        %s170 = scalar_lea.vmem [#allocation2], %s169
        // Predicated region
        $region29: #{tpu_custom_call.1} parent=27 // pred_check
          %p171 = pneg %p55
        $region30: #{tpu_custom_call.1} parent=27 // pred_check_branch
          %173 = sbr.rel (%p171) target = $region32
        $region31: #{tpu_custom_call.1} parent=27 // pred_region
          %174 = dma.done %s167, 1024
        $region32: #{tpu_custom_call.1} parent=27 // pred_fallthru
          _
        // Predicated region
        $region33: #{tpu_custom_call.1} parent=27 // pred_check
          %p175 = pneg %p76
        $region34: #{tpu_custom_call.1} parent=27 // pred_check_branch
          %177 = sbr.rel (%p175) target = $region36
        $region35: #{tpu_custom_call.1} parent=27 // pred_region
          %178 = dma.done [#allocation6], 1024
        $region36: #{tpu_custom_call.1} parent=27 // pred_fallthru
          _
        %s179 = sand.u32 %s42, 1
        %s180 = scalar_lea.sflag [#allocation3], %s179
        %s181 = sand.u32 %s42, 1
        %s182 = smul.addr %s181, 64
        %s183 = scalar_lea.vmem [#allocation2], %s182
        %p184 = pneg %p55
        %p185 = pneg %p52
        %p186 = pneg %p76
        %p187 = pneg %p73
        %p188 = pneg %p104
        %p189 = pneg %p101
        %s190 = sand.u32 %s91, 1
        %s191 = scalar_lea.sflag [#allocation4], %s190
        %s192 = sand.u32 %s91, 1
        %s193 = smul.addr %s192, 16
        %s194 = scalar_lea.vmem [#allocation7], %s193
        %v195 = vld [vmem:[%s170] sm:$0xff]
        %v196 = vld [vmem:[%s170 + $0x8] sm:$0xff]
        %v197 = vld [vmem:[#allocation5] sm:$0xff]
        %v198 = vld [vmem:[#allocation5 + $0x8] sm:$0xff]
        %s199 = scalar_lea.vmem %s170, 16 [#allocation2]
        %v200 = vld [vmem:[%s199] sm:$0xff]
        %v201 = vld [vmem:[%s199 + $0x8] sm:$0xff]
        %s202 = scalar_lea.vmem [#allocation5], 16
        %v203 = vld [vmem:[%s202] sm:$0xff]
        %v204 = vld [vmem:[%s202 + $0x8] sm:$0xff]
        %vm205 = vcmask 130048
        %v207 = vsel %vm205, %v200, 0
        %v210 = vsel %vm205, %v201, 0
        %212 = vmatprep.subr.mxu0 0.0
        %213 = vmatpush1.msra.mxu0 0.0
        %214 = vmatprep.subr.mxu0 0.0
        %215 = vmatpush1.msra.mxu0 0.0
        %216 = vmatprep.subr.mxu0 0.0
        %217 = vmatpush1.msra.mxu0 0.0
        %218 = vmatprep.subr.mxu0 0.0
        %219 = vmatpush1.msra.mxu0 0.0
        %220 = vmatprep.subr.mxu0 0.0
        %221 = vmatpush1.msra.mxu0 0.0
        %222 = vmatprep.subr.mxu0 0.0
        %223 = vmatpush1.msra.mxu0 0.0
        %224 = vmatprep.subr.mxu0 0.0
        %225 = vmatpush1.msra.mxu0 0.0
        %226 = vmatprep.subr.mxu0 0.0
        %227 = vmatpush1.msra.mxu0 0.0
        %228 = vmatprep.subr.mxu0 0.0
        %229 = vmatpush1.msra.mxu0 0.0
        %230 = vmatprep.subr.mxu0 0.0
        %231 = vmatpush1.msra.mxu0 0.0
        %232 = vmatprep.subr.mxu0 0.0
        %233 = vmatpush1.msra.mxu0 0.0
        %234 = vmatprep.subr.mxu0 0.0
        %235 = vmatpush1.msra.mxu0 0.0
        %236 = vmatprep.subr.mxu0 0.0
        %237 = vmatpush1.msra.mxu0 0.0
        %238 = vmatprep.subr.mxu0 0.0
        %239 = vmatpush1.msra.mxu0 0.0
        %240 = vmatprep.subr.mxu0 0.0
        %241 = vmatpush1.msra.mxu0 %v204
        %242 = vmatprep.subr.mxu0 0.0
        %243 = vmatpush1.msra.mxu0 %v203
        %244 = vmatprep.subr.mxu0 0.0
        %245 = vmatpush2.msra.mxu0 0.0
        %246 = vmatprep.subr.mxu0 0.0
        %247 = vmatpush2.msra.mxu0 0.0
        %248 = vmatprep.subr.mxu0 0.0
        %249 = vmatpush2.msra.mxu0 0.0
        %250 = vmatprep.subr.mxu0 0.0
        %251 = vmatpush2.msra.mxu0 0.0
        %252 = vmatprep.subr.mxu0 0.0
        %253 = vmatpush2.msra.mxu0 0.0
        %254 = vmatprep.subr.mxu0 0.0
        %255 = vmatpush2.msra.mxu0 0.0
        %256 = vmatprep.subr.mxu0 0.0
        %257 = vmatpush2.msra.mxu0 0.0
        %258 = vmatprep.subr.mxu0 0.0
        %259 = vmatpush2.msra.mxu0 0.0
        %260 = vmatprep.subr.mxu0 0.0
        %261 = vmatpush2.msra.mxu0 0.0
        %262 = vmatprep.subr.mxu0 0.0
        %263 = vmatpush2.msra.mxu0 0.0
        %264 = vmatprep.subr.mxu0 0.0
        %265 = vmatpush2.msra.mxu0 0.0
        %266 = vmatprep.subr.mxu0 0.0
        %267 = vmatpush2.msra.mxu0 0.0
        %268 = vmatprep.subr.mxu0 0.0
        %269 = vmatpush2.msra.mxu0 0.0
        %270 = vmatprep.subr.mxu0 0.0
        %271 = vmatpush2.msra.mxu0 0.0
        %272 = vmatprep.subr.mxu0 0.0
        %273 = vmatpush2.msra.mxu0 0.0
        %274 = vmatprep.subr.mxu0 0.0
        %275 = vmatpush2.msra.mxu0 0.0
        %276 = vmatprep.mubr.f32.mxu0 0.0
        %277 = vmatmul.mubr.f32.gmra.mxu0 %v207
        %v278 = vpop.f32.mrf.mxu0
        %v279 = vadd.f32 0.0, %v278
        %v280 = vpop.f32.mrf.mxu0
        %281 = vmatprep.mubr.f32.mxu0 0.0
        %282 = vmatmul.mubr.f32.gmra.mxu0 %v210
        %v283 = vpop.f32.mrf.mxu0
        %v284 = vadd.f32 0.0, %v283
        %v285 = vpop.f32.mrf.mxu0
        %286 = vdwg.mxu0
        %v288 = vsel %vm205, %v195, 0
        %v291 = vsel %vm205, %v196, 0
        %293 = vmatprep.subr.mxu0 0.0
        %294 = vmatpush1.msra.mxu0 0.0
        %295 = vmatprep.subr.mxu0 0.0
        %296 = vmatpush1.msra.mxu0 0.0
        %297 = vmatprep.subr.mxu0 0.0
        %298 = vmatpush1.msra.mxu0 0.0
        %299 = vmatprep.subr.mxu0 0.0
        %300 = vmatpush1.msra.mxu0 0.0
        %301 = vmatprep.subr.mxu0 0.0
        %302 = vmatpush1.msra.mxu0 0.0
        %303 = vmatprep.subr.mxu0 0.0
        %304 = vmatpush1.msra.mxu0 0.0
        %305 = vmatprep.subr.mxu0 0.0
        %306 = vmatpush1.msra.mxu0 0.0
        %307 = vmatprep.subr.mxu0 0.0
        %308 = vmatpush1.msra.mxu0 0.0
        %309 = vmatprep.subr.mxu0 0.0
        %310 = vmatpush1.msra.mxu0 0.0
        %311 = vmatprep.subr.mxu0 0.0
        %312 = vmatpush1.msra.mxu0 0.0
        %313 = vmatprep.subr.mxu0 0.0
        %314 = vmatpush1.msra.mxu0 0.0
        %315 = vmatprep.subr.mxu0 0.0
        %316 = vmatpush1.msra.mxu0 0.0
        %317 = vmatprep.subr.mxu0 0.0
        %318 = vmatpush1.msra.mxu0 0.0
        %319 = vmatprep.subr.mxu0 0.0
        %320 = vmatpush1.msra.mxu0 0.0
        %321 = vmatprep.subr.mxu0 0.0
        %322 = vmatpush1.msra.mxu0 %v198
        %323 = vmatprep.subr.mxu0 0.0
        %324 = vmatpush1.msra.mxu0 %v197
        %325 = vmatprep.subr.mxu0 0.0
        %326 = vmatpush2.msra.mxu0 0.0
        %327 = vmatprep.subr.mxu0 0.0
        %328 = vmatpush2.msra.mxu0 0.0
        %329 = vmatprep.subr.mxu0 0.0
        %330 = vmatpush2.msra.mxu0 0.0
        %331 = vmatprep.subr.mxu0 0.0
        %332 = vmatpush2.msra.mxu0 0.0
        %333 = vmatprep.subr.mxu0 0.0
        %334 = vmatpush2.msra.mxu0 0.0
        %335 = vmatprep.subr.mxu0 0.0
        %336 = vmatpush2.msra.mxu0 0.0
        %337 = vmatprep.subr.mxu0 0.0
        %338 = vmatpush2.msra.mxu0 0.0
        %339 = vmatprep.subr.mxu0 0.0
        %340 = vmatpush2.msra.mxu0 0.0
        %341 = vmatprep.subr.mxu0 0.0
        %342 = vmatpush2.msra.mxu0 0.0
        %343 = vmatprep.subr.mxu0 0.0
        %344 = vmatpush2.msra.mxu0 0.0
        %345 = vmatprep.subr.mxu0 0.0
        %346 = vmatpush2.msra.mxu0 0.0
        %347 = vmatprep.subr.mxu0 0.0
        %348 = vmatpush2.msra.mxu0 0.0
        %349 = vmatprep.subr.mxu0 0.0
        %350 = vmatpush2.msra.mxu0 0.0
        %351 = vmatprep.subr.mxu0 0.0
        %352 = vmatpush2.msra.mxu0 0.0
        %353 = vmatprep.subr.mxu0 0.0
        %354 = vmatpush2.msra.mxu0 0.0
        %355 = vmatprep.subr.mxu0 0.0
        %356 = vmatpush2.msra.mxu0 0.0
        %357 = vmatprep.mubr.f32.mxu0 0.0
        %358 = vmatmul.mubr.f32.gmra.mxu0 %v288
        %v359 = vpop.f32.mrf.mxu0
        %v360 = vadd.f32 %v279, %v359
        %v361 = vpop.f32.mrf.mxu0
        %362 = vmatprep.mubr.f32.mxu0 0.0
        %363 = vmatmul.mubr.f32.gmra.mxu0 %v291
        %v364 = vpop.f32.mrf.mxu0
        %v365 = vadd.f32 %v284, %v364
        %v366 = vpop.f32.mrf.mxu0
        %367 = vdwg.mxu0
        %s368 = scalar_lea.vmem %s170, 32 [#allocation2]
        %v369 = vld [vmem:[%s368] sm:$0xff]
        %v370 = vld [vmem:[%s368 + $0x8] sm:$0xff]
        %s371 = scalar_lea.vmem [#allocation5], 32
        %v372 = vld [vmem:[%s371] sm:$0xff]
        %v373 = vld [vmem:[%s371 + $0x8] sm:$0xff]
        %v375 = vsel %vm205, %v369, 0
        %v378 = vsel %vm205, %v370, 0
        %380 = vmatprep.subr.mxu0 0.0
        %381 = vmatpush1.msra.mxu0 0.0
        %382 = vmatprep.subr.mxu0 0.0
        %383 = vmatpush1.msra.mxu0 0.0
        %384 = vmatprep.subr.mxu0 0.0
        %385 = vmatpush1.msra.mxu0 0.0
        %386 = vmatprep.subr.mxu0 0.0
        %387 = vmatpush1.msra.mxu0 0.0
        %388 = vmatprep.subr.mxu0 0.0
        %389 = vmatpush1.msra.mxu0 0.0
        %390 = vmatprep.subr.mxu0 0.0
        %391 = vmatpush1.msra.mxu0 0.0
        %392 = vmatprep.subr.mxu0 0.0
        %393 = vmatpush1.msra.mxu0 0.0
        %394 = vmatprep.subr.mxu0 0.0
        %395 = vmatpush1.msra.mxu0 0.0
        %396 = vmatprep.subr.mxu0 0.0
        %397 = vmatpush1.msra.mxu0 0.0
        %398 = vmatprep.subr.mxu0 0.0
        %399 = vmatpush1.msra.mxu0 0.0
        %400 = vmatprep.subr.mxu0 0.0
        %401 = vmatpush1.msra.mxu0 0.0
        %402 = vmatprep.subr.mxu0 0.0
        %403 = vmatpush1.msra.mxu0 0.0
        %404 = vmatprep.subr.mxu0 0.0
        %405 = vmatpush1.msra.mxu0 0.0
        %406 = vmatprep.subr.mxu0 0.0
        %407 = vmatpush1.msra.mxu0 0.0
        %408 = vmatprep.subr.mxu0 0.0
        %409 = vmatpush1.msra.mxu0 %v373
        %410 = vmatprep.subr.mxu0 0.0
        %411 = vmatpush1.msra.mxu0 %v372
        %412 = vmatprep.subr.mxu0 0.0
        %413 = vmatpush2.msra.mxu0 0.0
        %414 = vmatprep.subr.mxu0 0.0
        %415 = vmatpush2.msra.mxu0 0.0
        %416 = vmatprep.subr.mxu0 0.0
        %417 = vmatpush2.msra.mxu0 0.0
        %418 = vmatprep.subr.mxu0 0.0
        %419 = vmatpush2.msra.mxu0 0.0
        %420 = vmatprep.subr.mxu0 0.0
        %421 = vmatpush2.msra.mxu0 0.0
        %422 = vmatprep.subr.mxu0 0.0
        %423 = vmatpush2.msra.mxu0 0.0
        %424 = vmatprep.subr.mxu0 0.0
        %425 = vmatpush2.msra.mxu0 0.0
        %426 = vmatprep.subr.mxu0 0.0
        %427 = vmatpush2.msra.mxu0 0.0
        %428 = vmatprep.subr.mxu0 0.0
        %429 = vmatpush2.msra.mxu0 0.0
        %430 = vmatprep.subr.mxu0 0.0
        %431 = vmatpush2.msra.mxu0 0.0
        %432 = vmatprep.subr.mxu0 0.0
        %433 = vmatpush2.msra.mxu0 0.0
        %434 = vmatprep.subr.mxu0 0.0
        %435 = vmatpush2.msra.mxu0 0.0
        %436 = vmatprep.subr.mxu0 0.0
        %437 = vmatpush2.msra.mxu0 0.0
        %438 = vmatprep.subr.mxu0 0.0
        %439 = vmatpush2.msra.mxu0 0.0
        %440 = vmatprep.subr.mxu0 0.0
        %441 = vmatpush2.msra.mxu0 0.0
        %442 = vmatprep.subr.mxu0 0.0
        %443 = vmatpush2.msra.mxu0 0.0
        %444 = vmatprep.mubr.f32.mxu0 0.0
        %445 = vmatmul.mubr.f32.gmra.mxu0 %v375
        %v446 = vpop.f32.mrf.mxu0
        %v447 = vadd.f32 0.0, %v446
        %v448 = vpop.f32.mrf.mxu0
        %449 = vmatprep.mubr.f32.mxu0 0.0
        %450 = vmatmul.mubr.f32.gmra.mxu0 %v378
        %v451 = vpop.f32.mrf.mxu0
        %v452 = vadd.f32 0.0, %v451
        %v453 = vpop.f32.mrf.mxu0
        %454 = vdwg.mxu0
        %v455 = vadd.f32 %v360, %v447
        %v456 = vadd.f32 %v365, %v452
        %s457 = scalar_lea.vmem %s170, 48 [#allocation2]
        %v458 = vld [vmem:[%s457] sm:$0xff]
        %v459 = vld [vmem:[%s457 + $0x8] sm:$0xff]
        %s460 = scalar_lea.vmem [#allocation5], 48
        %v461 = vld [vmem:[%s460] sm:$0xff]
        %v462 = vld [vmem:[%s460 + $0x8] sm:$0xff]
        %v464 = vsel %vm205, %v458, 0
        %v467 = vsel %vm205, %v459, 0
        %469 = vmatprep.subr.mxu0 0.0
        %470 = vmatpush1.msra.mxu0 0.0
        %471 = vmatprep.subr.mxu0 0.0
        %472 = vmatpush1.msra.mxu0 0.0
        %473 = vmatprep.subr.mxu0 0.0
        %474 = vmatpush1.msra.mxu0 0.0
        %475 = vmatprep.subr.mxu0 0.0
        %476 = vmatpush1.msra.mxu0 0.0
        %477 = vmatprep.subr.mxu0 0.0
        %478 = vmatpush1.msra.mxu0 0.0
        %479 = vmatprep.subr.mxu0 0.0
        %480 = vmatpush1.msra.mxu0 0.0
        %481 = vmatprep.subr.mxu0 0.0
        %482 = vmatpush1.msra.mxu0 0.0
        %483 = vmatprep.subr.mxu0 0.0
        %484 = vmatpush1.msra.mxu0 0.0
        %485 = vmatprep.subr.mxu0 0.0
        %486 = vmatpush1.msra.mxu0 0.0
        %487 = vmatprep.subr.mxu0 0.0
        %488 = vmatpush1.msra.mxu0 0.0
        %489 = vmatprep.subr.mxu0 0.0
        %490 = vmatpush1.msra.mxu0 0.0
        %491 = vmatprep.subr.mxu0 0.0
        %492 = vmatpush1.msra.mxu0 0.0
        %493 = vmatprep.subr.mxu0 0.0
        %494 = vmatpush1.msra.mxu0 0.0
        %495 = vmatprep.subr.mxu0 0.0
        %496 = vmatpush1.msra.mxu0 0.0
        %497 = vmatprep.subr.mxu0 0.0
        %498 = vmatpush1.msra.mxu0 %v462
        %499 = vmatprep.subr.mxu0 0.0
        %500 = vmatpush1.msra.mxu0 %v461
        %501 = vmatprep.subr.mxu0 0.0
        %502 = vmatpush2.msra.mxu0 0.0
        %503 = vmatprep.subr.mxu0 0.0
        %504 = vmatpush2.msra.mxu0 0.0
        %505 = vmatprep.subr.mxu0 0.0
        %506 = vmatpush2.msra.mxu0 0.0
        %507 = vmatprep.subr.mxu0 0.0
        %508 = vmatpush2.msra.mxu0 0.0
        %509 = vmatprep.subr.mxu0 0.0
        %510 = vmatpush2.msra.mxu0 0.0
        %511 = vmatprep.subr.mxu0 0.0
        %512 = vmatpush2.msra.mxu0 0.0
        %513 = vmatprep.subr.mxu0 0.0
        %514 = vmatpush2.msra.mxu0 0.0
        %515 = vmatprep.subr.mxu0 0.0
        %516 = vmatpush2.msra.mxu0 0.0
        %517 = vmatprep.subr.mxu0 0.0
        %518 = vmatpush2.msra.mxu0 0.0
        %519 = vmatprep.subr.mxu0 0.0
        %520 = vmatpush2.msra.mxu0 0.0
        %521 = vmatprep.subr.mxu0 0.0
        %522 = vmatpush2.msra.mxu0 0.0
        %523 = vmatprep.subr.mxu0 0.0
        %524 = vmatpush2.msra.mxu0 0.0
        %525 = vmatprep.subr.mxu0 0.0
        %526 = vmatpush2.msra.mxu0 0.0
        %527 = vmatprep.subr.mxu0 0.0
        %528 = vmatpush2.msra.mxu0 0.0
        %529 = vmatprep.subr.mxu0 0.0
        %530 = vmatpush2.msra.mxu0 0.0
        %531 = vmatprep.subr.mxu0 0.0
        %532 = vmatpush2.msra.mxu0 0.0
        %533 = vmatprep.mubr.f32.mxu0 0.0
        %534 = vmatmul.mubr.f32.gmra.mxu0 %v464
        %v535 = vpop.f32.mrf.mxu0
        %v536 = vadd.f32 0.0, %v535
        %v537 = vpop.f32.mrf.mxu0
        %538 = vmatprep.mubr.f32.mxu0 0.0
        %539 = vmatmul.mubr.f32.gmra.mxu0 %v467
        %v540 = vpop.f32.mrf.mxu0
        %v541 = vadd.f32 0.0, %v540
        %v542 = vpop.f32.mrf.mxu0
        %543 = vdwg.mxu0
        %v544 = vadd.f32 %v455, %v536
        %v545 = vadd.f32 %v456, %v541
        %vm546 = vcmask 523264
        %547 = vst.msk [vmem:[%s194] sm:$0xff] %vm546, %v544
        %548 = vst.msk [vmem:[%s194 + $0x8] sm:$0xff] %vm546, %v545
        %s549 = sand.u32 %s91, 1
        %s550 = scalar_lea.sflag [#allocation4], %s549
        %s551 = sand.u32 %s91, 1
        %s552 = smul.addr %s551, 16
        %s553 = scalar_lea.vmem [#allocation7], %s552
        // Predicated region
        $region37: #{tpu_custom_call.1} parent=27 // pred_check
          %p554 = pneg %p101
        $region38: #{tpu_custom_call.1} parent=27 // pred_check_branch
          %556 = sbr.rel (%p554) target = $region40
        $region39: #{tpu_custom_call.1} parent=27 // pred_region
          %s558 = ssub.s32 256, 256
          %559 = vsyncadd %s550, %s558
          %s560 = smul.addr %s25, 2
          %s561 = smul.addr %s24, 2
          %s562 = sadd.s32 %s560, %s561
          %s563 = smul.addr %s562, 128
          %s564 = scalar_lea.hbm %s2, %s563
          %s565 = sshll.u32 %s553, 4
          %s566 = int_to_ptr.vmem [resolvable:$true] %s565
          %571 = dma.vmem_to_hbm [thread:$0]  %s566, 256, %s564, %s550, 128, 128, 8
        $region40: #{tpu_custom_call.1} parent=27 // pred_fallthru
          _
      $region28: #{tpu_custom_call.1} parent=5 // pred_fallthru
        _
      %p572 = scmp.le.s32.totalorder 2, %s15
      // Predicated region
      $region41: #{tpu_custom_call.1} parent=5 // pred_check
        %p573 = pneg %p572
      $region42: #{tpu_custom_call.1} parent=5 // pred_check_branch
        %575 = sbr.rel (%p573) target = $region44
      $region43: #{tpu_custom_call.1} parent=5 // pred_region
        %s576 = ssub.s32 %s15, 2
        // Predicated region
        $region45: #{tpu_custom_call.1} parent=43 // pred_check
          %p577 = pneg %p107
        $region46: #{tpu_custom_call.1} parent=43 // pred_check_branch
          %579 = sbr.rel (%p577) target = $region48
        $region47: #{tpu_custom_call.1} parent=43 // pred_region
          %s580 = sand.u32 %s92, 1
          %s581 = scalar_lea.sflag [#allocation4], %s580
          %s582 = sand.u32 %s92, 1
          %s583 = smul.addr %s582, 16
          %s584 = scalar_lea.vmem [#allocation7], %s583
          %585 = dma.done %s581, 256
        $region48: #{tpu_custom_call.1} parent=43 // pred_fallthru
          _
      $region44: #{tpu_custom_call.1} parent=5 // pred_fallthru
        _
    $region6: #{tpu_custom_call.1} parent=1 // loop_footer
      %s19 = sadd.s32 1, %s15
    $region7: #{tpu_custom_call.1} parent=1 // loop_footer_branch
      %14 = sbr.rel target = $region3
    $region8: #{tpu_custom_call.1} parent=1 // loop_exit
      _
    %586 = vsyncpa [#allocation3], 1
    %s587 = scalar_lea.sflag [#allocation3], 1
    %588 = vsyncpa %s587, 1
    %589 = vsyncpa [#allocation6], 1
    %590 = vsyncpa [#allocation4], 1
    %s591 = scalar_lea.sflag [#allocation4], 1
    %592 = vsyncpa %s591, 1

</llo_original>
